<compile_context>
chip_gen: v7x
topology: tpu7x:2x2x1
jax: 0.10.0
libtpu: 0.0.40
codegen_flags: <defaults>
</compile_context>

<pallas_src>
import math
import jax
import jax.numpy as jnp
from jax import lax
from jax.experimental import pallas as pl
from jax.experimental.pallas import tpu as pltpu

_INV_SQRT2 = 1.0 / math.sqrt(2.0)


def _ffn_kernel(x_ref, w1_ref, b1_ref, w2_ref, b2_ref, o_ref, acc_ref):
    # x_ref:  (tm, dim)      — resident across the hidden (k) axis
    # w1_ref: (dim, th)      — hidden-slice of W1
    # b1_ref: (1, th)        — hidden-slice of b1
    # w2_ref: (th, dim)      — hidden-slice of W2
    # b2_ref: (1, dim)
    # o_ref:  (tm, dim)      — same block across k (written on last k step)
    # acc_ref:(tm, dim) f32  — VMEM accumulator over the hidden axis
    k = pl.program_id(1)

    @pl.when(k == 0)
    def _():
        acc_ref[...] = jnp.zeros_like(acc_ref)

    # First linear (native-dtype MXU operands, f32 accumulate) + bias in f32.
    h = jnp.dot(x_ref[...], w1_ref[...], preferred_element_type=jnp.float32)
    h = h + b1_ref[...].astype(jnp.float32)

    # Exact GELU (erf form — matches PyTorch nn.GELU default), computed in f32.
    h = 0.5 * h * (1.0 + lax.erf(h * _INV_SQRT2))

    # TODO(synk): Dropout with p>0 would need pltpu.prng_* masking here; p=0.0 -> identity.

    # Second linear: accumulate this hidden slice's contribution.
    acc_ref[...] += jnp.dot(h.astype(w2_ref.dtype), w2_ref[...],
                            preferred_element_type=jnp.float32)

    @pl.when(k == pl.num_programs(1) - 1)
    def _():
        o_ref[...] = (acc_ref[...] + b2_ref[...].astype(jnp.float32)).astype(o_ref.dtype)


def _round_up(a, b):
    return (a + b - 1) // b * b


def feed_forward(x, w1, b1, w2, b2, *, tile_m=256, tile_h=512):
    """x: (B, S, dim). w1: (dim, hidden), b1: (hidden,), w2: (hidden, dim), b2: (dim,)."""
    B, S, dim = x.shape
    hidden = w1.shape[1]
    M = B * S

    x2d = x.reshape(M, dim)

    # Row tiling: use a big MXU-friendly tile; pad rows so no assert / tail fallback.
    tm = min(tile_m, _round_up(M, 8))
    Mp = _round_up(M, tm)
    if Mp != M:
        x2d = jnp.pad(x2d, ((0, Mp - M), (0, 0)))

    # Hidden tiling: if hidden fits in one tile keep it whole, else tile (lane-dense)
    # and zero-pad hidden (zero-padded columns contribute gelu(0) @ 0 == 0).
    if hidden <= tile_h:
        th = hidden
        Hp = hidden
    else:
        th = tile_h
        Hp = _round_up(hidden, th)
    if Hp != hidden:
        w1 = jnp.pad(w1, ((0, 0), (0, Hp - hidden)))
        b1 = jnp.pad(b1, ((0, Hp - hidden),))
        w2 = jnp.pad(w2, ((0, Hp - hidden), (0, 0)))

    b1_2d = b1.reshape(1, Hp)
    b2_2d = b2.reshape(1, dim)

    grid = (Mp // tm, Hp // th)

    out2d = pl.pallas_call(
        _ffn_kernel,
        out_shape=jax.ShapeDtypeStruct((Mp, dim), x.dtype),
        grid_spec=pltpu.PrefetchScalarGridSpec(
            num_scalar_prefetch=0,
            grid=grid,
            in_specs=[
                pl.BlockSpec((tm, dim), lambda i, k: (i, 0)),   # x rows (resident over k)
                pl.BlockSpec((dim, th), lambda i, k: (0, k)),   # W1 hidden-slice
                pl.BlockSpec((1, th), lambda i, k: (0, k)),     # b1 hidden-slice
                pl.BlockSpec((th, dim), lambda i, k: (k, 0)),   # W2 hidden-slice
                pl.BlockSpec((1, dim), lambda i, k: (0, 0)),    # b2
            ],
            out_specs=pl.BlockSpec((tm, dim), lambda i, k: (i, 0)),
            scratch_shapes=[pltpu.VMEM((tm, dim), jnp.float32)],
        ),
        compiler_params=pltpu.CompilerParams(
            # Row axis parallel (megacore / v7x 2-TC sharding), hidden axis is the
            # reduction -> arbitrary and innermost.
            dimension_semantics=("parallel", "arbitrary")),
    )(x2d, w1, b1_2d, w2, b2_2d)

    if Mp != M:
        out2d = out2d[:M]
    return out2d.reshape(B, S, dim)


def _reference(x, w1, b1, w2, b2):
    h = jnp.dot(x, w1, precision=lax.Precision.HIGHEST) + b1
    h = 0.5 * h * (1.0 + lax.erf(h * _INV_SQRT2))
    return jnp.dot(h, w2, precision=lax.Precision.HIGHEST) + b2


if __name__ == "__main__":
    # Small shapes consistent with the module; dim/hidden are multiples of 128 so the
    # output store is lane-dense (unmasked vst).
    B, S, dim, hidden = 2, 64, 128, 256

    key = jax.random.PRNGKey(0)
    kx, kw1, kb1, kw2, kb2 = jax.random.split(key, 5)

    x = jax.random.normal(kx, (B, S, dim), dtype=jnp.float32)

    # Deterministic init mimicking nn.Linear's uniform(-1/sqrt(fan_in), 1/sqrt(fan_in)).
    lim1 = 1.0 / math.sqrt(dim)
    w1 = jax.random.uniform(kw1, (dim, hidden), jnp.float32, -lim1, lim1)
    b1 = jax.random.uniform(kb1, (hidden,), jnp.float32, -lim1, lim1)
    lim2 = 1.0 / math.sqrt(hidden)
    w2 = jax.random.uniform(kw2, (hidden, dim), jnp.float32, -lim2, lim2)
    b2 = jax.random.uniform(kb2, (dim,), jnp.float32, -lim2, lim2)

    out = feed_forward(x, w1, b1, w2, b2)
    out = jax.block_until_ready(out)

    ref = _reference(x, w1, b1, w2, b2)
    assert out.shape == (B, S, dim)
    assert jnp.allclose(out, ref, atol=2e-4, rtol=2e-4), "mismatch vs reference"

    print("KERNEL_OK")
</pallas_src>

<mosaic_0001>
module attributes {stable_mosaic.version = 11 : i64} {
  func.func @_ffn_kernel(%arg0: i32, %arg1: i32, %arg2: memref<128x128xf32, #tpu.memory_space<vmem>>, %arg3: memref<128x256xf32, #tpu.memory_space<vmem>>, %arg4: memref<1x256xf32, #tpu.memory_space<vmem>>, %arg5: memref<256x128xf32, #tpu.memory_space<vmem>>, %arg6: memref<1x128xf32, #tpu.memory_space<vmem>>, %arg7: memref<128x128xf32, #tpu.memory_space<vmem>>, %arg8: memref<128x128xf32, #tpu.memory_space<vmem>>) attributes {dimension_semantics = [#tpu.dimension_semantics<parallel>, #tpu.dimension_semantics<arbitrary>], iteration_bounds = array<i64: 1, 1>, scalar_prefetch = 0 : i64, scratch_operands = 1 : i64, tpu.core_type = #tpu.core_type<tc>, window_params = [{transform_indices = @transform_0, window_bounds = array<i64: 128, 128>}, {transform_indices = @transform_1, window_bounds = array<i64: 128, 256>}, {transform_indices = @transform_2, window_bounds = array<i64: 1, 256>}, {transform_indices = @transform_3, window_bounds = array<i64: 256, 128>}, {pipeline_mode = #tpu.pipeline_mode<synchronous>, transform_indices = @transform_4, window_bounds = array<i64: 1, 128>}, {transform_indices = @transform_5, window_bounds = array<i64: 128, 128>}]} {
    %c0_i32 = arith.constant 0 : i32
    %0 = arith.cmpi eq, %arg1, %c0_i32 : i32
    %1 = arith.extui %0 : i1 to i32
    %c0_i32_0 = arith.constant 0 : i32
    %2 = arith.cmpi ne, %1, %c0_i32_0 : i32
    scf.if %2 {
      %cst_18 = arith.constant 0.000000e+00 : f32
      %25 = vector.broadcast %cst_18 : f32 to vector<128x128xf32>
      %c0_19 = arith.constant 0 : index
      %c0_20 = arith.constant 0 : index
      %26 = vector.load %arg8[%c0_19, %c0_20] : memref<128x128xf32, #tpu.memory_space<vmem>>, vector<128x128xf32>
      tpu.vector_store %arg8[%c0_19, %c0_20], %25 {strides = array<i32>} : memref<128x128xf32, #tpu.memory_space<vmem>>, vector<128x128xf32>,
    } else {
    }
    %c0 = arith.constant 0 : index
    %c0_1 = arith.constant 0 : index
    %3 = vector.load %arg2[%c0, %c0_1] : memref<128x128xf32, #tpu.memory_space<vmem>>, vector<128x128xf32>
    %c0_2 = arith.constant 0 : index
    %c0_3 = arith.constant 0 : index
    %4 = vector.load %arg3[%c0_2, %c0_3] : memref<128x256xf32, #tpu.memory_space<vmem>>, vector<128x256xf32>
    %cst = arith.constant dense<0.000000e+00> : vector<128x256xf32>
    %5 = tpu.matmul %3, %4, %cst {dimension_numbers = #tpu.dot_dimension_numbers<[1], [0], [0], [1], [0, 0, 1, 1], [], []>} : vector<128x128xf32>, vector<128x256xf32>, vector<128x256xf32> -> vector<128x256xf32>
    %c0_4 = arith.constant 0 : index
    %c0_5 = arith.constant 0 : index
    %6 = vector.load %arg4[%c0_4, %c0_5] : memref<1x256xf32, #tpu.memory_space<vmem>>, vector<1x256xf32>
    %7 = vector.broadcast %6 : vector<1x256xf32> to vector<128x256xf32>
    %8 = arith.addf %5, %7 : vector<128x256xf32>
    %cst_6 = arith.constant 5.000000e-01 : f32
    %9 = vector.broadcast %cst_6 : f32 to vector<128x256xf32>
    %10 = arith.mulf %9, %8 : vector<128x256xf32>
    %cst_7 = arith.constant 0.707106769 : f32
    %11 = vector.broadcast %cst_7 : f32 to vector<128x256xf32>
    %12 = arith.mulf %8, %11 : vector<128x256xf32>
    %13 = math.erf %12 : vector<128x256xf32>
    %cst_8 = arith.constant 1.000000e+00 : f32
    %14 = vector.broadcast %cst_8 : f32 to vector<128x256xf32>
    %15 = arith.addf %14, %13 : vector<128x256xf32>
    %16 = arith.mulf %10, %15 : vector<128x256xf32>
    %c0_9 = arith.constant 0 : index
    %c0_10 = arith.constant 0 : index
    %17 = vector.load %arg8[%c0_9, %c0_10] : memref<128x128xf32, #tpu.memory_space<vmem>>, vector<128x128xf32>
    %c0_11 = arith.constant 0 : index
    %c0_12 = arith.constant 0 : index
    %18 = vector.load %arg5[%c0_11, %c0_12] : memref<256x128xf32, #tpu.memory_space<vmem>>, vector<256x128xf32>
    %cst_13 = arith.constant dense<0.000000e+00> : vector<128x128xf32>
    %19 = tpu.matmul %16, %18, %cst_13 {dimension_numbers = #tpu.dot_dimension_numbers<[1], [0], [0], [1], [0, 0, 1, 1], [], []>} : vector<128x256xf32>, vector<256x128xf32>, vector<128x128xf32> -> vector<128x128xf32>
    %20 = arith.addf %17, %19 : vector<128x128xf32>
    %c0_14 = arith.constant 0 : index
    %c0_15 = arith.constant 0 : index
    %21 = vector.load %arg8[%c0_14, %c0_15] : memref<128x128xf32, #tpu.memory_space<vmem>>, vector<128x128xf32>
    tpu.vector_store %arg8[%c0_14, %c0_15], %20 {strides = array<i32>} : memref<128x128xf32, #tpu.memory_space<vmem>>, vector<128x128xf32>,
    %c0_i32_16 = arith.constant 0 : i32
    %22 = arith.cmpi eq, %arg1, %c0_i32_16 : i32
    %23 = arith.extui %22 : i1 to i32
    %c0_i32_17 = arith.constant 0 : i32
    %24 = arith.cmpi ne, %23, %c0_i32_17 : i32
    scf.if %24 {
      %c0_18 = arith.constant 0 : index
      %c0_19 = arith.constant 0 : index
      %25 = vector.load %arg8[%c0_18, %c0_19] : memref<128x128xf32, #tpu.memory_space<vmem>>, vector<128x128xf32>
      %c0_20 = arith.constant 0 : index
      %c0_21 = arith.constant 0 : index
      %26 = vector.load %arg6[%c0_20, %c0_21] : memref<1x128xf32, #tpu.memory_space<vmem>>, vector<1x128xf32>
      %27 = vector.broadcast %26 : vector<1x128xf32> to vector<128x128xf32>
      %28 = arith.addf %25, %27 : vector<128x128xf32>
      %c0_22 = arith.constant 0 : index
      %c0_23 = arith.constant 0 : index
      %29 = vector.load %arg7[%c0_22, %c0_23] : memref<128x128xf32, #tpu.memory_space<vmem>>, vector<128x128xf32>
      tpu.vector_store %arg7[%c0_22, %c0_23], %28 {strides = array<i32>} : memref<128x128xf32, #tpu.memory_space<vmem>>, vector<128x128xf32>,
    } else {
    }
    return
  }
  func.func @transform_0(%arg0: i32, %arg1: i32) -> (i32, i32) {
    %c0_i32 = arith.constant 0 : i32
    %c0_i32_0 = arith.constant 0 : i32
    return %arg0, %c0_i32 : i32, i32
  }
  func.func @transform_1(%arg0: i32, %arg1: i32) -> (i32, i32) {
    %c0_i32 = arith.constant 0 : i32
    %c0_i32_0 = arith.constant 0 : i32
    return %c0_i32, %arg1 : i32, i32
  }
  func.func @transform_2(%arg0: i32, %arg1: i32) -> (i32, i32) {
    %c0_i32 = arith.constant 0 : i32
    %c0_i32_0 = arith.constant 0 : i32
    return %c0_i32, %arg1 : i32, i32
  }
  func.func @transform_3(%arg0: i32, %arg1: i32) -> (i32, i32) {
    %c0_i32 = arith.constant 0 : i32
    %c0_i32_0 = arith.constant 0 : i32
    return %arg1, %c0_i32 : i32, i32
  }
  func.func @transform_4(%arg0: i32, %arg1: i32) -> (i32, i32) {
    %c0_i32 = arith.constant 0 : i32
    %c0_i32_0 = arith.constant 0 : i32
    %c0_i32_1 = arith.constant 0 : i32
    return %c0_i32, %c0_i32_0 : i32, i32
  }
  func.func @transform_5(%arg0: i32, %arg1: i32) -> (i32, i32) {
    %c0_i32 = arith.constant 0 : i32
    %c0_i32_0 = arith.constant 0 : i32
    return %arg0, %c0_i32 : i32, i32
  }
}

</mosaic_0001>

<llo_original>
// kernel: tpu_custom_call.1
$region0: #{tpu_custom_call.1}
  #allocation0 [shape = 'u32[]', space=smem, size = 0x4, offset = 0x4, fixed_abs, tag = 'smem constant byte address 0x4 - core index']
  #allocation1 [shape = 'u32[144,128]{1,0:T(1,128)}', space=vmem, size = 0x12000, scoped, tag = 'internal scratch']
  #allocation2 [shape = 'f32[128,128]{1,0:T(8,128)}', space=vmem, size = 0x10000, scoped, tag = 'scratch operand']
  %s0 = inlined_call_operand.hbm [shape: f32[128,128], index: 0, kind: input, shape index: {}]
  %s1 = inlined_call_operand.hbm [shape: f32[128,256], index: 1, kind: input, shape index: {}]
  %s2 = inlined_call_operand.vmem [shape: f32[1,256], index: 2, kind: input, shape index: {}]
  %s3 = inlined_call_operand.hbm [shape: f32[256,128], index: 3, kind: input, shape index: {}]
  %s4 = inlined_call_operand.vmem [shape: f32[1,128], index: 4, kind: input, shape index: {}]
  %s5 = inlined_call_operand.hbm [shape: f32[128,128], index: 5, kind: output, shape index: {}]
  %s6 = sld [smem:[#allocation0]]
  $region50: #{tpu_custom_call.1} parent=0
    _
  %s8 = ssub.s32 1, %s6
  %s9 = scalar_select 0, %s8, %s6
  $region1: #{tpu_custom_call.1} parent=0
    #allocation3 [shape = 'u8[65536]{0}', space=vmem, size = 0x10000, scoped, tag = 'input window, operand 0, single buffered']
    #allocation4 [shape = 's32[1]{0}', space=sflag, size = 0x4, scoped, tag = 'scoped memory for tpu_custom_call.1']
    #allocation5 [shape = 's32[1]{0}', space=sflag, size = 0x4, scoped, tag = 'scoped memory for tpu_custom_call.1']
    #allocation6 [shape = 'u8[131072]{0}', space=vmem, size = 0x20000, scoped, tag = 'input window, operand 1, single buffered']
    #allocation7 [shape = 's32[1]{0}', space=sflag, size = 0x4, scoped, tag = 'scoped memory for tpu_custom_call.1']
    #allocation8 [shape = 'u8[131072]{0}', space=vmem, size = 0x20000, scoped, tag = 'input window, operand 3, single buffered']
    #allocation9 [shape = 'u8[65536]{0}', space=vmem, size = 0x10000, scoped, tag = 'output window, operand 0, single buffered']
    %10 = vsyncpa [#allocation4], 0
    %11 = vsyncpa [#allocation7], 0
    %12 = vsyncpa [#allocation5], 0
    // Predicated region
    $region2: #{tpu_custom_call.1} parent=1 // pred_check
      _
    $region3: #{tpu_custom_call.1} parent=1 // pred_check_branch
      %14 = sbr.rel (0) target = $region5
    $region4: #{tpu_custom_call.1} parent=1 // pred_region
      %s16 = ssub.s32 2048, 2048
      %17 = vsyncadd [#allocation4], %s16
      %s18 = sshll.u32 [#allocation3], 4
      %s19 = int_to_ptr.vmem [resolvable:$true] %s18
      %24 = dma.hbm_to_vmem [thread:$0]  %s0, 2048, %s19, [#allocation4], 128, 128, 8
    $region5: #{tpu_custom_call.1} parent=1 // pred_fallthru
      _
    // Predicated region
    $region6: #{tpu_custom_call.1} parent=1 // pred_check
      _
    $region7: #{tpu_custom_call.1} parent=1 // pred_check_branch
      %26 = sbr.rel (0) target = $region9
    $region8: #{tpu_custom_call.1} parent=1 // pred_region
      %s28 = ssub.s32 4096, 4096
      %29 = vsyncadd [#allocation7], %s28
      %s30 = sshll.u32 [#allocation6], 4
      %s31 = int_to_ptr.vmem [resolvable:$true] %s30
      %36 = dma.hbm_to_vmem [thread:$0]  %s1, 4096, %s31, [#allocation7], 256, 256, 16
    $region9: #{tpu_custom_call.1} parent=1 // pred_fallthru
      _
    // Predicated region
    $region10: #{tpu_custom_call.1} parent=1 // pred_check
      _
    $region11: #{tpu_custom_call.1} parent=1 // pred_check_branch
      %38 = sbr.rel (0) target = $region13
    $region12: #{tpu_custom_call.1} parent=1 // pred_region
      _
    $region13: #{tpu_custom_call.1} parent=1 // pred_fallthru
      _
    // Predicated region
    $region14: #{tpu_custom_call.1} parent=1 // pred_check
      _
    $region15: #{tpu_custom_call.1} parent=1 // pred_check_branch
      %40 = sbr.rel (0) target = $region17
    $region16: #{tpu_custom_call.1} parent=1 // pred_region
      %s42 = ssub.s32 4096, 4096
      %43 = vsyncadd [#allocation7], %s42
      %s44 = sshll.u32 [#allocation8], 4
      %s45 = int_to_ptr.vmem [resolvable:$true] %s44
      %50 = dma.hbm_to_vmem [thread:$0]  %s3, 4096, %s45, [#allocation7], 128, 128, 8
    $region17: #{tpu_custom_call.1} parent=1 // pred_fallthru
      _
    // Predicated region
    $region18: #{tpu_custom_call.1} parent=1 // pred_check
      _
    $region19: #{tpu_custom_call.1} parent=1 // pred_check_branch
      %52 = sbr.rel (0) target = $region21
    $region20: #{tpu_custom_call.1} parent=1 // pred_region
      _
    $region21: #{tpu_custom_call.1} parent=1 // pred_fallthru
      _
    // Predicated region
    $region22: #{tpu_custom_call.1} parent=1 // pred_check
      _
    $region23: #{tpu_custom_call.1} parent=1 // pred_check_branch
      %54 = sbr.rel (0) target = $region25
    $region24: #{tpu_custom_call.1} parent=1 // pred_region
      %55 = dma.done [#allocation4], 2048
    $region25: #{tpu_custom_call.1} parent=1 // pred_fallthru
      _
    // Predicated region
    $region26: #{tpu_custom_call.1} parent=1 // pred_check
      _
    $region27: #{tpu_custom_call.1} parent=1 // pred_check_branch
      %57 = sbr.rel (0) target = $region29
    $region28: #{tpu_custom_call.1} parent=1 // pred_region
      %58 = dma.done [#allocation7], 4096
    $region29: #{tpu_custom_call.1} parent=1 // pred_fallthru
      _
    // Predicated region
    $region30: #{tpu_custom_call.1} parent=1 // pred_check
      _
    $region31: #{tpu_custom_call.1} parent=1 // pred_check_branch
      %60 = sbr.rel (0) target = $region33
    $region32: #{tpu_custom_call.1} parent=1 // pred_region
      %61 = dma.done [#allocation7], 4096
    $region33: #{tpu_custom_call.1} parent=1 // pred_fallthru
      _
    %p62 = scmp.eq.s32.totalorder 0, 0
    // Predicated region
    $region34: #{tpu_custom_call.1} parent=1 // pred_check
      %p63 = pneg %p62
    $region35: #{tpu_custom_call.1} parent=1 // pred_check_branch
      %65 = sbr.rel (%p63) target = $region37
    $region36: #{tpu_custom_call.1} parent=1 // pred_region
      %66 = vst [vmem:[#allocation2] sm:$0xff] 0.0
      %67 = vst [vmem:[#allocation2 + $0x8] sm:$0xff] 0.0
      %68 = vst [vmem:[#allocation2 + $0x10] sm:$0xff] 0.0
      %69 = vst [vmem:[#allocation2 + $0x18] sm:$0xff] 0.0
      %70 = vst [vmem:[#allocation2 + $0x20] sm:$0xff] 0.0
      %71 = vst [vmem:[#allocation2 + $0x28] sm:$0xff] 0.0
      %72 = vst [vmem:[#allocation2 + $0x30] sm:$0xff] 0.0
      %73 = vst [vmem:[#allocation2 + $0x38] sm:$0xff] 0.0
      %74 = vst [vmem:[#allocation2 + $0x40] sm:$0xff] 0.0
      %75 = vst [vmem:[#allocation2 + $0x48] sm:$0xff] 0.0
      %76 = vst [vmem:[#allocation2 + $0x50] sm:$0xff] 0.0
      %77 = vst [vmem:[#allocation2 + $0x58] sm:$0xff] 0.0
      %78 = vst [vmem:[#allocation2 + $0x60] sm:$0xff] 0.0
      %79 = vst [vmem:[#allocation2 + $0x68] sm:$0xff] 0.0
      %80 = vst [vmem:[#allocation2 + $0x70] sm:$0xff] 0.0
      %81 = vst [vmem:[#allocation2 + $0x78] sm:$0xff] 0.0
    $region37: #{tpu_custom_call.1} parent=1 // pred_fallthru
      _
    %v82 = vld [vmem:[#allocation3] sm:$0xff]
    %v83 = vld [vmem:[#allocation3 + $0x8] sm:$0xff]
    %v84 = vld [vmem:[#allocation3 + $0x10] sm:$0xff]
    %v85 = vld [vmem:[#allocation3 + $0x18] sm:$0xff]
    %v86 = vld [vmem:[#allocation3 + $0x20] sm:$0xff]
    %v87 = vld [vmem:[#allocation3 + $0x28] sm:$0xff]
    %v88 = vld [vmem:[#allocation3 + $0x30] sm:$0xff]
    %v89 = vld [vmem:[#allocation3 + $0x38] sm:$0xff]
    %v90 = vld [vmem:[#allocation3 + $0x40] sm:$0xff]
    %v91 = vld [vmem:[#allocation3 + $0x48] sm:$0xff]
    %v92 = vld [vmem:[#allocation3 + $0x50] sm:$0xff]
    %v93 = vld [vmem:[#allocation3 + $0x58] sm:$0xff]
    %v94 = vld [vmem:[#allocation3 + $0x60] sm:$0xff]
    %v95 = vld [vmem:[#allocation3 + $0x68] sm:$0xff]
    %v96 = vld [vmem:[#allocation3 + $0x70] sm:$0xff]
    %v97 = vld [vmem:[#allocation3 + $0x78] sm:$0xff]
    %v98 = vld [vmem:[#allocation6] sm:$0xff]
    %v99 = vld [vmem:[#allocation6 + $0x8] sm:$0xff]
    %v100 = vld [vmem:[#allocation6 + $0x10] sm:$0xff]
    %v101 = vld [vmem:[#allocation6 + $0x18] sm:$0xff]
    %v102 = vld [vmem:[#allocation6 + $0x20] sm:$0xff]
    %v103 = vld [vmem:[#allocation6 + $0x28] sm:$0xff]
    %v104 = vld [vmem:[#allocation6 + $0x30] sm:$0xff]
    %v105 = vld [vmem:[#allocation6 + $0x38] sm:$0xff]
    %v106 = vld [vmem:[#allocation6 + $0x40] sm:$0xff]
    %v107 = vld [vmem:[#allocation6 + $0x48] sm:$0xff]
    %v108 = vld [vmem:[#allocation6 + $0x50] sm:$0xff]
    %v109 = vld [vmem:[#allocation6 + $0x58] sm:$0xff]
    %v110 = vld [vmem:[#allocation6 + $0x60] sm:$0xff]
    %v111 = vld [vmem:[#allocation6 + $0x68] sm:$0xff]
    %v112 = vld [vmem:[#allocation6 + $0x70] sm:$0xff]
    %v113 = vld [vmem:[#allocation6 + $0x78] sm:$0xff]
    %v114 = vld [vmem:[#allocation6 + $0x80] sm:$0xff]
    %v115 = vld [vmem:[#allocation6 + $0x88] sm:$0xff]
    %v116 = vld [vmem:[#allocation6 + $0x90] sm:$0xff]
    %v117 = vld [vmem:[#allocation6 + $0x98] sm:$0xff]
    %v118 = vld [vmem:[#allocation6 + $0xa0] sm:$0xff]
    %v119 = vld [vmem:[#allocation6 + $0xa8] sm:$0xff]
    %v120 = vld [vmem:[#allocation6 + $0xb0] sm:$0xff]
    %v121 = vld [vmem:[#allocation6 + $0xb8] sm:$0xff]
    %v122 = vld [vmem:[#allocation6 + $0xc0] sm:$0xff]
    %v123 = vld [vmem:[#allocation6 + $0xc8] sm:$0xff]
    %v124 = vld [vmem:[#allocation6 + $0xd0] sm:$0xff]
    %v125 = vld [vmem:[#allocation6 + $0xd8] sm:$0xff]
    %v126 = vld [vmem:[#allocation6 + $0xe0] sm:$0xff]
    %v127 = vld [vmem:[#allocation6 + $0xe8] sm:$0xff]
    %v128 = vld [vmem:[#allocation6 + $0xf0] sm:$0xff]
    %v129 = vld [vmem:[#allocation6 + $0xf8] sm:$0xff]
    %v130 = vld [vmem:[%s2] sm:$0x3]
    %v132 = vlaneseq
    %v133 = vshrl.u32 %v132, 7
    %v134 = vsub.s32 0, %v133
    %v135 = vrot.slane %v130, %v134
    %v136 = vlaneseq
    %v137 = vshrl.u32 %v136, 7
    %v138 = vsub.s32 1, %v137
    %v139 = vrot.slane %v130, %v138
    %142 = vmatprep.subr.mxu0 %v99
    %143 = vmatpush1.msra.mxu0 %v98
    %144 = vmatprep.subr.mxu0 %v101
    %145 = vmatpush1.msra.mxu0 %v100
    %146 = vmatprep.subr.mxu0 %v103
    %147 = vmatpush1.msra.mxu0 %v102
    %148 = vmatprep.subr.mxu0 %v105
    %149 = vmatpush1.msra.mxu0 %v104
    %150 = vmatprep.subr.mxu0 %v107
    %151 = vmatpush1.msra.mxu0 %v106
    %152 = vmatprep.subr.mxu0 %v109
    %153 = vmatpush1.msra.mxu0 %v108
    %154 = vmatprep.subr.mxu0 %v111
    %155 = vmatpush1.msra.mxu0 %v110
    %156 = vmatprep.subr.mxu0 %v113
    %157 = vmatpush1.msra.mxu0 %v112
    %158 = vmatprep.subr.mxu0 %v115
    %159 = vmatpush1.msra.mxu0 %v114
    %160 = vmatprep.subr.mxu0 %v117
    %161 = vmatpush1.msra.mxu0 %v116
    %162 = vmatprep.subr.mxu0 %v119
    %163 = vmatpush1.msra.mxu0 %v118
    %164 = vmatprep.subr.mxu0 %v121
    %165 = vmatpush1.msra.mxu0 %v120
    %166 = vmatprep.subr.mxu0 %v123
    %167 = vmatpush1.msra.mxu0 %v122
    %168 = vmatprep.subr.mxu0 %v125
    %169 = vmatpush1.msra.mxu0 %v124
    %170 = vmatprep.subr.mxu0 %v127
    %171 = vmatpush1.msra.mxu0 %v126
    %172 = vmatprep.subr.mxu0 %v129
    %173 = vmatpush1.msra.mxu0 %v128
    %174 = vmatprep.subr.mxu0 0.0
    %175 = vmatpush1.msra.mxu0 0.0
    %176 = vmatprep.subr.mxu0 0.0
    %177 = vmatpush1.msra.mxu0 0.0
    %178 = vmatprep.subr.mxu0 0.0
    %179 = vmatpush1.msra.mxu0 0.0
    %180 = vmatprep.subr.mxu0 0.0
    %181 = vmatpush1.msra.mxu0 0.0
    %182 = vmatprep.subr.mxu0 0.0
    %183 = vmatpush1.msra.mxu0 0.0
    %184 = vmatprep.subr.mxu0 0.0
    %185 = vmatpush1.msra.mxu0 0.0
    %186 = vmatprep.subr.mxu0 0.0
    %187 = vmatpush1.msra.mxu0 0.0
    %188 = vmatprep.subr.mxu0 0.0
    %189 = vmatpush1.msra.mxu0 0.0
    %190 = vmatprep.subr.mxu0 0.0
    %191 = vmatpush1.msra.mxu0 0.0
    %192 = vmatprep.subr.mxu0 0.0
    %193 = vmatpush1.msra.mxu0 0.0
    %194 = vmatprep.subr.mxu0 0.0
    %195 = vmatpush1.msra.mxu0 0.0
    %196 = vmatprep.subr.mxu0 0.0
    %197 = vmatpush1.msra.mxu0 0.0
    %198 = vmatprep.subr.mxu0 0.0
    %199 = vmatpush1.msra.mxu0 0.0
    %200 = vmatprep.subr.mxu0 0.0
    %201 = vmatpush1.msra.mxu0 0.0
    %202 = vmatprep.subr.mxu0 0.0
    %203 = vmatpush1.msra.mxu0 0.0
    %204 = vmatprep.subr.mxu0 0.0
    %205 = vmatpush1.msra.mxu0 0.0
    %206 = vmatprep.mubr.f32.mxu0 0.0
    %207 = vmatmul.mubr.f32.gmra.mrb[0].mxu0 %v82
    %v208 = vpop.f32.mrb[0].mxu0
    %v209 = vadd.f32 %v135, %v208
    %v210 = vpop.f32.mrb[0].mxu0
    %v211 = vadd.f32 %v139, %v210
    %212 = vmatprep.mubr.f32.mxu0 0.0
    %213 = vmatmul.mubr.f32.gmra.mrb[0].mxu0 %v83
    %v214 = vpop.f32.mrb[0].mxu0
    %v215 = vadd.f32 %v135, %v214
    %v216 = vpop.f32.mrb[0].mxu0
    %v217 = vadd.f32 %v139, %v216
    %218 = vmatprep.mubr.f32.mxu0 0.0
    %219 = vmatmul.mubr.f32.gmra.mrb[0].mxu0 %v84
    %v220 = vpop.f32.mrb[0].mxu0
    %v221 = vadd.f32 %v135, %v220
    %v222 = vpop.f32.mrb[0].mxu0
    %v223 = vadd.f32 %v139, %v222
    %224 = vmatprep.mubr.f32.mxu0 0.0
    %225 = vmatmul.mubr.f32.gmra.mrb[0].mxu0 %v85
    %v226 = vpop.f32.mrb[0].mxu0
    %v227 = vadd.f32 %v135, %v226
    %v228 = vpop.f32.mrb[0].mxu0
    %v229 = vadd.f32 %v139, %v228
    %230 = vmatprep.mubr.f32.mxu0 0.0
    %231 = vmatmul.mubr.f32.gmra.mrb[0].mxu0 %v86
    %v232 = vpop.f32.mrb[0].mxu0
    %v233 = vadd.f32 %v135, %v232
    %v234 = vpop.f32.mrb[0].mxu0
    %v235 = vadd.f32 %v139, %v234
    %236 = vmatprep.mubr.f32.mxu0 0.0
    %237 = vmatmul.mubr.f32.gmra.mrb[0].mxu0 %v87
    %v238 = vpop.f32.mrb[0].mxu0
    %v239 = vadd.f32 %v135, %v238
    %v240 = vpop.f32.mrb[0].mxu0
    %v241 = vadd.f32 %v139, %v240
    %242 = vmatprep.mubr.f32.mxu0 0.0
    %243 = vmatmul.mubr.f32.gmra.mrb[0].mxu0 %v88
    %v244 = vpop.f32.mrb[0].mxu0
    %v245 = vadd.f32 %v135, %v244
    %v246 = vpop.f32.mrb[0].mxu0
    %v247 = vadd.f32 %v139, %v246
    %248 = vmatprep.mubr.f32.mxu0 0.0
    %249 = vmatmul.mubr.f32.gmra.mrb[0].mxu0 %v89
    %v250 = vpop.f32.mrb[0].mxu0
    %v251 = vadd.f32 %v135, %v250
    %v252 = vpop.f32.mrb[0].mxu0
    %v253 = vadd.f32 %v139, %v252
    %254 = vmatprep.mubr.f32.mxu0 0.0
    %255 = vmatmul.mubr.f32.gmra.mrb[0].mxu0 %v90
    %v256 = vpop.f32.mrb[0].mxu0
    %v257 = vadd.f32 %v135, %v256
    %v258 = vpop.f32.mrb[0].mxu0
    %v259 = vadd.f32 %v139, %v258
    %260 = vmatprep.mubr.f32.mxu0 0.0
    %261 = vmatmul.mubr.f32.gmra.mrb[0].mxu0 %v91
    %v262 = vpop.f32.mrb[0].mxu0
    %v263 = vadd.f32 %v135, %v262
    %v264 = vpop.f32.mrb[0].mxu0
    %v265 = vadd.f32 %v139, %v264
    %266 = vmatprep.mubr.f32.mxu0 0.0
    %267 = vmatmul.mubr.f32.gmra.mrb[0].mxu0 %v92
    %v268 = vpop.f32.mrb[0].mxu0
    %v269 = vadd.f32 %v135, %v268
    %v270 = vpop.f32.mrb[0].mxu0
    %v271 = vadd.f32 %v139, %v270
    %272 = vmatprep.mubr.f32.mxu0 0.0
    %273 = vmatmul.mubr.f32.gmra.mrb[0].mxu0 %v93
    %v274 = vpop.f32.mrb[0].mxu0
    %v275 = vadd.f32 %v135, %v274
    %v276 = vpop.f32.mrb[0].mxu0
    %v277 = vadd.f32 %v139, %v276
    %278 = vmatprep.mubr.f32.mxu0 0.0
    %279 = vmatmul.mubr.f32.gmra.mrb[0].mxu0 %v94
    %v280 = vpop.f32.mrb[0].mxu0
    %v281 = vadd.f32 %v135, %v280
    %v282 = vpop.f32.mrb[0].mxu0
    %v283 = vadd.f32 %v139, %v282
    %284 = vmatprep.mubr.f32.mxu0 0.0
    %285 = vmatmul.mubr.f32.gmra.mrb[0].mxu0 %v95
    %v286 = vpop.f32.mrb[0].mxu0
    %v287 = vadd.f32 %v135, %v286
    %v288 = vpop.f32.mrb[0].mxu0
    %v289 = vadd.f32 %v139, %v288
    %290 = vmatprep.mubr.f32.mxu0 0.0
    %291 = vmatmul.mubr.f32.gmra.mrb[0].mxu0 %v96
    %v292 = vpop.f32.mrb[0].mxu0
    %v293 = vadd.f32 %v135, %v292
    %v294 = vpop.f32.mrb[0].mxu0
    %v295 = vadd.f32 %v139, %v294
    %296 = vmatprep.mubr.f32.mxu0 0.0
    %297 = vmatmul.mubr.f32.gmra.mrb[0].mxu0 %v97
    %v298 = vpop.f32.mrb[0].mxu0
    %v299 = vadd.f32 %v135, %v298
    %v300 = vpop.f32.mrb[0].mxu0
    %v301 = vadd.f32 %v139, %v300
    %302 = vdwg.mxu0
    %v303 = vmul.f32 %v209, 0.5
    %v304 = vmul.f32 %v211, 0.5
    %v305 = vmul.f32 %v215, 0.5
    %v306 = vmul.f32 %v217, 0.5
    %v307 = vmul.f32 %v221, 0.5
    %v308 = vmul.f32 %v223, 0.5
    %v309 = vmul.f32 %v227, 0.5
    %v310 = vmul.f32 %v229, 0.5
    %v311 = vmul.f32 %v233, 0.5
    %v312 = vmul.f32 %v235, 0.5
    %v313 = vmul.f32 %v239, 0.5
    %v314 = vmul.f32 %v241, 0.5
    %v315 = vmul.f32 %v245, 0.5
    %v316 = vmul.f32 %v247, 0.5
    %v317 = vmul.f32 %v251, 0.5
    %v318 = vmul.f32 %v253, 0.5
    %v319 = vmul.f32 %v257, 0.5
    %v320 = vmul.f32 %v259, 0.5
    %v321 = vmul.f32 %v263, 0.5
    %v322 = vmul.f32 %v265, 0.5
    %v323 = vmul.f32 %v269, 0.5
    %v324 = vmul.f32 %v271, 0.5
    %v325 = vmul.f32 %v275, 0.5
    %v326 = vmul.f32 %v277, 0.5
    %v327 = vmul.f32 %v281, 0.5
    %v328 = vmul.f32 %v283, 0.5
    %v329 = vmul.f32 %v287, 0.5
    %v330 = vmul.f32 %v289, 0.5
    %v331 = vmul.f32 %v293, 0.5
    %v332 = vmul.f32 %v295, 0.5
    %v333 = vmul.f32 %v299, 0.5
    %v334 = vmul.f32 %v301, 0.5
    %v335 = vmul.f32 %v209, 0.70710677
    %v336 = vmul.f32 %v211, 0.70710677
    %v337 = vmul.f32 %v215, 0.70710677
    %v338 = vmul.f32 %v217, 0.70710677
    %v339 = vmul.f32 %v221, 0.70710677
    %v340 = vmul.f32 %v223, 0.70710677
    %v341 = vmul.f32 %v227, 0.70710677
    %v342 = vmul.f32 %v229, 0.70710677
    %v343 = vmul.f32 %v233, 0.70710677
    %v344 = vmul.f32 %v235, 0.70710677
    %v345 = vmul.f32 %v239, 0.70710677
    %v346 = vmul.f32 %v241, 0.70710677
    %v347 = vmul.f32 %v245, 0.70710677
    %v348 = vmul.f32 %v247, 0.70710677
    %v349 = vmul.f32 %v251, 0.70710677
    %v350 = vmul.f32 %v253, 0.70710677
    %v351 = vmul.f32 %v257, 0.70710677
    %v352 = vmul.f32 %v259, 0.70710677
    %v353 = vmul.f32 %v263, 0.70710677
    %v354 = vmul.f32 %v265, 0.70710677
    %v355 = vmul.f32 %v269, 0.70710677
    %v356 = vmul.f32 %v271, 0.70710677
    %v357 = vmul.f32 %v275, 0.70710677
    %v358 = vmul.f32 %v277, 0.70710677
    %v359 = vmul.f32 %v281, 0.70710677
    %v360 = vmul.f32 %v283, 0.70710677
    %v361 = vmul.f32 %v287, 0.70710677
    %v362 = vmul.f32 %v289, 0.70710677
    %v363 = vmul.f32 %v293, 0.70710677
    %v364 = vmul.f32 %v295, 0.70710677
    %v365 = vmul.f32 %v299, 0.70710677
    %v366 = vmul.f32 %v301, 0.70710677
    %v367 = verf.f32.pop %v335
    %v368 = verf.f32.pop %v336
    %v369 = verf.f32.pop %v337
    %v370 = verf.f32.pop %v338
    %v371 = verf.f32.pop %v339
    %v372 = verf.f32.pop %v340
    %v373 = verf.f32.pop %v341
    %v374 = verf.f32.pop %v342
    %v375 = verf.f32.pop %v343
    %v376 = verf.f32.pop %v344
    %v377 = verf.f32.pop %v345
    %v378 = verf.f32.pop %v346
    %v379 = verf.f32.pop %v347
    %v380 = verf.f32.pop %v348
    %v381 = verf.f32.pop %v349
    %v382 = verf.f32.pop %v350
    %v383 = verf.f32.pop %v351
    %v384 = verf.f32.pop %v352
    %v385 = verf.f32.pop %v353
    %v386 = verf.f32.pop %v354
    %v387 = verf.f32.pop %v355
    %v388 = verf.f32.pop %v356
    %v389 = verf.f32.pop %v357
    %v390 = verf.f32.pop %v358
    %v391 = verf.f32.pop %v359
    %v392 = verf.f32.pop %v360
    %v393 = verf.f32.pop %v361
    %v394 = verf.f32.pop %v362
    %v395 = verf.f32.pop %v363
    %v396 = verf.f32.pop %v364
    %v397 = verf.f32.pop %v365
    %v398 = verf.f32.pop %v366
    %v399 = vadd.f32 %v367, 1.0
    %v400 = vadd.f32 %v368, 1.0
    %v401 = vadd.f32 %v369, 1.0
    %v402 = vadd.f32 %v370, 1.0
    %v403 = vadd.f32 %v371, 1.0
    %v404 = vadd.f32 %v372, 1.0
    %v405 = vadd.f32 %v373, 1.0
    %v406 = vadd.f32 %v374, 1.0
    %v407 = vadd.f32 %v375, 1.0
    %v408 = vadd.f32 %v376, 1.0
    %v409 = vadd.f32 %v377, 1.0
    %v410 = vadd.f32 %v378, 1.0
    %v411 = vadd.f32 %v379, 1.0
    %v412 = vadd.f32 %v380, 1.0
    %v413 = vadd.f32 %v381, 1.0
    %v414 = vadd.f32 %v382, 1.0
    %v415 = vadd.f32 %v383, 1.0
    %v416 = vadd.f32 %v384, 1.0
    %v417 = vadd.f32 %v385, 1.0
    %v418 = vadd.f32 %v386, 1.0
    %v419 = vadd.f32 %v387, 1.0
    %v420 = vadd.f32 %v388, 1.0
    %v421 = vadd.f32 %v389, 1.0
    %v422 = vadd.f32 %v390, 1.0
    %v423 = vadd.f32 %v391, 1.0
    %v424 = vadd.f32 %v392, 1.0
    %v425 = vadd.f32 %v393, 1.0
    %v426 = vadd.f32 %v394, 1.0
    %v427 = vadd.f32 %v395, 1.0
    %v428 = vadd.f32 %v396, 1.0
    %v429 = vadd.f32 %v397, 1.0
    %v430 = vadd.f32 %v398, 1.0
    %v431 = vmul.f32 %v303, %v399
    %v432 = vmul.f32 %v304, %v400
    %v433 = vmul.f32 %v305, %v401
    %v434 = vmul.f32 %v306, %v402
    %v435 = vmul.f32 %v307, %v403
    %v436 = vmul.f32 %v308, %v404
    %v437 = vmul.f32 %v309, %v405
    %v438 = vmul.f32 %v310, %v406
    %v439 = vmul.f32 %v311, %v407
    %v440 = vmul.f32 %v312, %v408
    %v441 = vmul.f32 %v313, %v409
    %v442 = vmul.f32 %v314, %v410
    %v443 = vmul.f32 %v315, %v411
    %v444 = vmul.f32 %v316, %v412
    %v445 = vmul.f32 %v317, %v413
    %v446 = vmul.f32 %v318, %v414
    %v447 = vmul.f32 %v319, %v415
    %v448 = vmul.f32 %v320, %v416
    %v449 = vmul.f32 %v321, %v417
    %v450 = vmul.f32 %v322, %v418
    %v451 = vmul.f32 %v323, %v419
    %v452 = vmul.f32 %v324, %v420
    %v453 = vmul.f32 %v325, %v421
    %v454 = vmul.f32 %v326, %v422
    %v455 = vmul.f32 %v327, %v423
    %v456 = vmul.f32 %v328, %v424
    %v457 = vmul.f32 %v329, %v425
    %v458 = vmul.f32 %v330, %v426
    %v459 = vmul.f32 %v331, %v427
    %v460 = vmul.f32 %v332, %v428
    %v461 = vmul.f32 %v333, %v429
    %v462 = vmul.f32 %v334, %v430
    %v463 = vld [vmem:[#allocation2] sm:$0xff]
    %v464 = vld [vmem:[#allocation2 + $0x8] sm:$0xff]
    %v465 = vld [vmem:[#allocation2 + $0x10] sm:$0xff]
    %v466 = vld [vmem:[#allocation2 + $0x18] sm:$0xff]
    %v467 = vld [vmem:[#allocation2 + $0x20] sm:$0xff]
    %v468 = vld [vmem:[#allocation2 + $0x28] sm:$0xff]
    %v469 = vld [vmem:[#allocation2 + $0x30] sm:$0xff]
    %v470 = vld [vmem:[#allocation2 + $0x38] sm:$0xff]
    %v471 = vld [vmem:[#allocation2 + $0x40] sm:$0xff]
    %v472 = vld [vmem:[#allocation2 + $0x48] sm:$0xff]
    %v473 = vld [vmem:[#allocation2 + $0x50] sm:$0xff]
    %v474 = vld [vmem:[#allocation2 + $0x58] sm:$0xff]
    %v475 = vld [vmem:[#allocation2 + $0x60] sm:$0xff]
    %v476 = vld [vmem:[#allocation2 + $0x68] sm:$0xff]
    %v477 = vld [vmem:[#allocation2 + $0x70] sm:$0xff]
    %v478 = vld [vmem:[#allocation2 + $0x78] sm:$0xff]
    %v479 = vld [vmem:[#allocation8] sm:$0xff]
    %v480 = vld [vmem:[#allocation8 + $0x8] sm:$0xff]
    %v481 = vld [vmem:[#allocation8 + $0x10] sm:$0xff]
    %v482 = vld [vmem:[#allocation8 + $0x18] sm:$0xff]
    %v483 = vld [vmem:[#allocation8 + $0x20] sm:$0xff]
    %v484 = vld [vmem:[#allocation8 + $0x28] sm:$0xff]
    %v485 = vld [vmem:[#allocation8 + $0x30] sm:$0xff]
    %v486 = vld [vmem:[#allocation8 + $0x38] sm:$0xff]
    %v487 = vld [vmem:[#allocation8 + $0x40] sm:$0xff]
    %v488 = vld [vmem:[#allocation8 + $0x48] sm:$0xff]
    %v489 = vld [vmem:[#allocation8 + $0x50] sm:$0xff]
    %v490 = vld [vmem:[#allocation8 + $0x58] sm:$0xff]
    %v491 = vld [vmem:[#allocation8 + $0x60] sm:$0xff]
    %v492 = vld [vmem:[#allocation8 + $0x68] sm:$0xff]
    %v493 = vld [vmem:[#allocation8 + $0x70] sm:$0xff]
    %v494 = vld [vmem:[#allocation8 + $0x78] sm:$0xff]
    %v495 = vld [vmem:[#allocation8 + $0x80] sm:$0xff]
    %v496 = vld [vmem:[#allocation8 + $0x88] sm:$0xff]
    %v497 = vld [vmem:[#allocation8 + $0x90] sm:$0xff]
    %v498 = vld [vmem:[#allocation8 + $0x98] sm:$0xff]
    %v499 = vld [vmem:[#allocation8 + $0xa0] sm:$0xff]
    %v500 = vld [vmem:[#allocation8 + $0xa8] sm:$0xff]
    %v501 = vld [vmem:[#allocation8 + $0xb0] sm:$0xff]
    %v502 = vld [vmem:[#allocation8 + $0xb8] sm:$0xff]
    %v503 = vld [vmem:[#allocation8 + $0xc0] sm:$0xff]
    %v504 = vld [vmem:[#allocation8 + $0xc8] sm:$0xff]
    %v505 = vld [vmem:[#allocation8 + $0xd0] sm:$0xff]
    %v506 = vld [vmem:[#allocation8 + $0xd8] sm:$0xff]
    %v507 = vld [vmem:[#allocation8 + $0xe0] sm:$0xff]
    %v508 = vld [vmem:[#allocation8 + $0xe8] sm:$0xff]
    %v509 = vld [vmem:[#allocation8 + $0xf0] sm:$0xff]
    %v510 = vld [vmem:[#allocation8 + $0xf8] sm:$0xff]
    %511 = vmatprep.subr.mxu0 0.0
    %512 = vmatpush1.msra.mxu0 %v479
    %513 = vmatprep.subr.mxu0 0.0
    %514 = vmatpush1.msra.mxu0 %v480
    %515 = vmatprep.subr.mxu0 0.0
    %516 = vmatpush1.msra.mxu0 %v481
    %517 = vmatprep.subr.mxu0 0.0
    %518 = vmatpush1.msra.mxu0 %v482
    %519 = vmatprep.subr.mxu0 0.0
    %520 = vmatpush1.msra.mxu0 %v483
    %521 = vmatprep.subr.mxu0 0.0
    %522 = vmatpush1.msra.mxu0 %v484
    %523 = vmatprep.subr.mxu0 0.0
    %524 = vmatpush1.msra.mxu0 %v485
    %525 = vmatprep.subr.mxu0 0.0
    %526 = vmatpush1.msra.mxu0 %v486
    %527 = vmatprep.subr.mxu0 0.0
    %528 = vmatpush1.msra.mxu0 %v487
    %529 = vmatprep.subr.mxu0 0.0
    %530 = vmatpush1.msra.mxu0 %v488
    %531 = vmatprep.subr.mxu0 0.0
    %532 = vmatpush1.msra.mxu0 %v489
    %533 = vmatprep.subr.mxu0 0.0
    %534 = vmatpush1.msra.mxu0 %v490
    %535 = vmatprep.subr.mxu0 0.0
    %536 = vmatpush1.msra.mxu0 %v491
    %537 = vmatprep.subr.mxu0 0.0
    %538 = vmatpush1.msra.mxu0 %v492
    %539 = vmatprep.subr.mxu0 0.0
    %540 = vmatpush1.msra.mxu0 %v493
    %541 = vmatprep.subr.mxu0 0.0
    %542 = vmatpush1.msra.mxu0 %v494
    %543 = vmatprep.subr.mxu0 0.0
    %544 = vmatpush1.msra.mxu0 %v495
    %545 = vmatprep.subr.mxu0 0.0
    %546 = vmatpush1.msra.mxu0 %v496
    %547 = vmatprep.subr.mxu0 0.0
    %548 = vmatpush1.msra.mxu0 %v497
    %549 = vmatprep.subr.mxu0 0.0
    %550 = vmatpush1.msra.mxu0 %v498
    %551 = vmatprep.subr.mxu0 0.0
    %552 = vmatpush1.msra.mxu0 %v499
    %553 = vmatprep.subr.mxu0 0.0
    %554 = vmatpush1.msra.mxu0 %v500
    %555 = vmatprep.subr.mxu0 0.0
    %556 = vmatpush1.msra.mxu0 %v501
    %557 = vmatprep.subr.mxu0 0.0
    %558 = vmatpush1.msra.mxu0 %v502
    %559 = vmatprep.subr.mxu0 0.0
    %560 = vmatpush1.msra.mxu0 %v503
    %561 = vmatprep.subr.mxu0 0.0
    %562 = vmatpush1.msra.mxu0 %v504
    %563 = vmatprep.subr.mxu0 0.0
    %564 = vmatpush1.msra.mxu0 %v505
    %565 = vmatprep.subr.mxu0 0.0
    %566 = vmatpush1.msra.mxu0 %v506
    %567 = vmatprep.subr.mxu0 0.0
    %568 = vmatpush1.msra.mxu0 %v507
    %569 = vmatprep.subr.mxu0 0.0
    %570 = vmatpush1.msra.mxu0 %v508
    %571 = vmatprep.subr.mxu0 0.0
    %572 = vmatpush1.msra.mxu0 %v509
    %573 = vmatprep.subr.mxu0 0.0
    %574 = vmatpush1.msra.mxu0 %v510
    %575 = vmatprep.mubr.f32.mxu0 %v432
    %576 = vmatmul.mubr.f32.gmra.mrb[0].mxu0 %v431
    %v577 = vpop.f32.mrb[0].mxu0
    %v578 = vadd.f32 0.0, %v577
    %v579 = vpop.f32.mrb[0].mxu0
    %580 = vmatprep.mubr.f32.mxu0 %v434
    %581 = vmatmul.mubr.f32.gmra.mrb[0].mxu0 %v433
    %v582 = vpop.f32.mrb[0].mxu0
    %v583 = vadd.f32 0.0, %v582
    %v584 = vpop.f32.mrb[0].mxu0
    %585 = vmatprep.mubr.f32.mxu0 %v436
    %586 = vmatmul.mubr.f32.gmra.mrb[0].mxu0 %v435
    %v587 = vpop.f32.mrb[0].mxu0
    %v588 = vadd.f32 0.0, %v587
    %v589 = vpop.f32.mrb[0].mxu0
    %590 = vmatprep.mubr.f32.mxu0 %v438
    %591 = vmatmul.mubr.f32.gmra.mrb[0].mxu0 %v437
    %v592 = vpop.f32.mrb[0].mxu0
    %v593 = vadd.f32 0.0, %v592
    %v594 = vpop.f32.mrb[0].mxu0
    %595 = vmatprep.mubr.f32.mxu0 %v440
    %596 = vmatmul.mubr.f32.gmra.mrb[0].mxu0 %v439
    %v597 = vpop.f32.mrb[0].mxu0
    %v598 = vadd.f32 0.0, %v597
    %v599 = vpop.f32.mrb[0].mxu0
    %600 = vmatprep.mubr.f32.mxu0 %v442
    %601 = vmatmul.mubr.f32.gmra.mrb[0].mxu0 %v441
    %v602 = vpop.f32.mrb[0].mxu0
    %v603 = vadd.f32 0.0, %v602
    %v604 = vpop.f32.mrb[0].mxu0
    %605 = vmatprep.mubr.f32.mxu0 %v444
    %606 = vmatmul.mubr.f32.gmra.mrb[0].mxu0 %v443
    %v607 = vpop.f32.mrb[0].mxu0
    %v608 = vadd.f32 0.0, %v607
    %v609 = vpop.f32.mrb[0].mxu0
    %610 = vmatprep.mubr.f32.mxu0 %v446
    %611 = vmatmul.mubr.f32.gmra.mrb[0].mxu0 %v445
    %v612 = vpop.f32.mrb[0].mxu0
    %v613 = vadd.f32 0.0, %v612
    %v614 = vpop.f32.mrb[0].mxu0
    %615 = vmatprep.mubr.f32.mxu0 %v448
    %616 = vmatmul.mubr.f32.gmra.mrb[0].mxu0 %v447
    %v617 = vpop.f32.mrb[0].mxu0
    %v618 = vadd.f32 0.0, %v617
    %v619 = vpop.f32.mrb[0].mxu0
    %620 = vmatprep.mubr.f32.mxu0 %v450
    %621 = vmatmul.mubr.f32.gmra.mrb[0].mxu0 %v449
    %v622 = vpop.f32.mrb[0].mxu0
    %v623 = vadd.f32 0.0, %v622
    %v624 = vpop.f32.mrb[0].mxu0
    %625 = vmatprep.mubr.f32.mxu0 %v452
    %626 = vmatmul.mubr.f32.gmra.mrb[0].mxu0 %v451
    %v627 = vpop.f32.mrb[0].mxu0
    %v628 = vadd.f32 0.0, %v627
    %v629 = vpop.f32.mrb[0].mxu0
    %630 = vmatprep.mubr.f32.mxu0 %v454
    %631 = vmatmul.mubr.f32.gmra.mrb[0].mxu0 %v453
    %v632 = vpop.f32.mrb[0].mxu0
    %v633 = vadd.f32 0.0, %v632
    %v634 = vpop.f32.mrb[0].mxu0
    %635 = vmatprep.mubr.f32.mxu0 %v456
    %636 = vmatmul.mubr.f32.gmra.mrb[0].mxu0 %v455
    %v637 = vpop.f32.mrb[0].mxu0
    %v638 = vadd.f32 0.0, %v637
    %v639 = vpop.f32.mrb[0].mxu0
    %640 = vmatprep.mubr.f32.mxu0 %v458
    %641 = vmatmul.mubr.f32.gmra.mrb[0].mxu0 %v457
    %v642 = vpop.f32.mrb[0].mxu0
    %v643 = vadd.f32 0.0, %v642
    %v644 = vpop.f32.mrb[0].mxu0
    %645 = vmatprep.mubr.f32.mxu0 %v460
    %646 = vmatmul.mubr.f32.gmra.mrb[0].mxu0 %v459
    %v647 = vpop.f32.mrb[0].mxu0
    %v648 = vadd.f32 0.0, %v647
    %v649 = vpop.f32.mrb[0].mxu0
    %650 = vmatprep.mubr.f32.mxu0 %v462
    %651 = vmatmul.mubr.f32.gmra.mrb[0].mxu0 %v461
    %v652 = vpop.f32.mrb[0].mxu0
    %v653 = vadd.f32 0.0, %v652
    %v654 = vpop.f32.mrb[0].mxu0
    %655 = vdwg.mxu0
    %v656 = vadd.f32 %v463, %v578
    %v657 = vadd.f32 %v464, %v583
    %v658 = vadd.f32 %v465, %v588
    %v659 = vadd.f32 %v466, %v593
    %v660 = vadd.f32 %v467, %v598
    %v661 = vadd.f32 %v468, %v603
    %v662 = vadd.f32 %v469, %v608
    %v663 = vadd.f32 %v470, %v613
    %v664 = vadd.f32 %v471, %v618
    %v665 = vadd.f32 %v472, %v623
    %v666 = vadd.f32 %v473, %v628
    %v667 = vadd.f32 %v474, %v633
    %v668 = vadd.f32 %v475, %v638
    %v669 = vadd.f32 %v476, %v643
    %v670 = vadd.f32 %v477, %v648
    %v671 = vadd.f32 %v478, %v653
    %672 = vst [vmem:[#allocation2] sm:$0xff] %v656
    %673 = vst [vmem:[#allocation2 + $0x8] sm:$0xff] %v657
    %674 = vst [vmem:[#allocation2 + $0x10] sm:$0xff] %v658
    %675 = vst [vmem:[#allocation2 + $0x18] sm:$0xff] %v659
    %676 = vst [vmem:[#allocation2 + $0x20] sm:$0xff] %v660
    %677 = vst [vmem:[#allocation2 + $0x28] sm:$0xff] %v661
    %678 = vst [vmem:[#allocation2 + $0x30] sm:$0xff] %v662
    %679 = vst [vmem:[#allocation2 + $0x38] sm:$0xff] %v663
    %680 = vst [vmem:[#allocation2 + $0x40] sm:$0xff] %v664
    %681 = vst [vmem:[#allocation2 + $0x48] sm:$0xff] %v665
    %682 = vst [vmem:[#allocation2 + $0x50] sm:$0xff] %v666
    %683 = vst [vmem:[#allocation2 + $0x58] sm:$0xff] %v667
    %684 = vst [vmem:[#allocation2 + $0x60] sm:$0xff] %v668
    %685 = vst [vmem:[#allocation2 + $0x68] sm:$0xff] %v669
    %686 = vst [vmem:[#allocation2 + $0x70] sm:$0xff] %v670
    %687 = vst [vmem:[#allocation2 + $0x78] sm:$0xff] %v671
    // Predicated region
    $region38: #{tpu_custom_call.1} parent=1 // pred_check
      %p688 = pneg %p62
    $region39: #{tpu_custom_call.1} parent=1 // pred_check_branch
      %690 = sbr.rel (%p688) target = $region41
    $region40: #{tpu_custom_call.1} parent=1 // pred_region
      %v691 = vld [vmem:[#allocation2] sm:$0xff]
      %v692 = vld [vmem:[#allocation2 + $0x8] sm:$0xff]
      %v693 = vld [vmem:[#allocation2 + $0x10] sm:$0xff]
      %v694 = vld [vmem:[#allocation2 + $0x18] sm:$0xff]
      %v695 = vld [vmem:[#allocation2 + $0x20] sm:$0xff]
      %v696 = vld [vmem:[#allocation2 + $0x28] sm:$0xff]
      %v697 = vld [vmem:[#allocation2 + $0x30] sm:$0xff]
      %v698 = vld [vmem:[#allocation2 + $0x38] sm:$0xff]
      %v699 = vld [vmem:[#allocation2 + $0x40] sm:$0xff]
      %v700 = vld [vmem:[#allocation2 + $0x48] sm:$0xff]
      %v701 = vld [vmem:[#allocation2 + $0x50] sm:$0xff]
      %v702 = vld [vmem:[#allocation2 + $0x58] sm:$0xff]
      %v703 = vld [vmem:[#allocation2 + $0x60] sm:$0xff]
      %v704 = vld [vmem:[#allocation2 + $0x68] sm:$0xff]
      %v705 = vld [vmem:[#allocation2 + $0x70] sm:$0xff]
      %v706 = vld [vmem:[#allocation2 + $0x78] sm:$0xff]
      %v707 = vld [vmem:[%s4] sm:$0x1]
      %v709 = vlaneseq
      %v710 = vshrl.u32 %v709, 7
      %v711 = vsub.s32 0, %v710
      %v712 = vrot.slane %v707, %v711
      %v714 = vadd.f32 %v691, %v712
      %v715 = vadd.f32 %v692, %v712
      %v716 = vadd.f32 %v693, %v712
      %v717 = vadd.f32 %v694, %v712
      %v718 = vadd.f32 %v695, %v712
      %v719 = vadd.f32 %v696, %v712
      %v720 = vadd.f32 %v697, %v712
      %v721 = vadd.f32 %v698, %v712
      %v722 = vadd.f32 %v699, %v712
      %v723 = vadd.f32 %v700, %v712
      %v724 = vadd.f32 %v701, %v712
      %v725 = vadd.f32 %v702, %v712
      %v726 = vadd.f32 %v703, %v712
      %v727 = vadd.f32 %v704, %v712
      %v728 = vadd.f32 %v705, %v712
      %v729 = vadd.f32 %v706, %v712
      %730 = vst [vmem:[#allocation9] sm:$0xff] %v714
      %731 = vst [vmem:[#allocation9 + $0x8] sm:$0xff] %v715
      %732 = vst [vmem:[#allocation9 + $0x10] sm:$0xff] %v716
      %733 = vst [vmem:[#allocation9 + $0x18] sm:$0xff] %v717
      %734 = vst [vmem:[#allocation9 + $0x20] sm:$0xff] %v718
      %735 = vst [vmem:[#allocation9 + $0x28] sm:$0xff] %v719
      %736 = vst [vmem:[#allocation9 + $0x30] sm:$0xff] %v720
      %737 = vst [vmem:[#allocation9 + $0x38] sm:$0xff] %v721
      %738 = vst [vmem:[#allocation9 + $0x40] sm:$0xff] %v722
      %739 = vst [vmem:[#allocation9 + $0x48] sm:$0xff] %v723
      %740 = vst [vmem:[#allocation9 + $0x50] sm:$0xff] %v724
      %741 = vst [vmem:[#allocation9 + $0x58] sm:$0xff] %v725
      %742 = vst [vmem:[#allocation9 + $0x60] sm:$0xff] %v726
      %743 = vst [vmem:[#allocation9 + $0x68] sm:$0xff] %v727
      %744 = vst [vmem:[#allocation9 + $0x70] sm:$0xff] %v728
      %745 = vst [vmem:[#allocation9 + $0x78] sm:$0xff] %v729
    $region41: #{tpu_custom_call.1} parent=1 // pred_fallthru
      _
    // Predicated region
    $region42: #{tpu_custom_call.1} parent=1 // pred_check
      _
    $region43: #{tpu_custom_call.1} parent=1 // pred_check_branch
      %747 = sbr.rel (0) target = $region45
    $region44: #{tpu_custom_call.1} parent=1 // pred_region
      %s749 = ssub.s32 2048, 2048
      %750 = vsyncadd [#allocation5], %s749
      %s751 = sshll.u32 [#allocation9], 4
      %s752 = int_to_ptr.vmem [resolvable:$true] %s751
      %757 = dma.vmem_to_hbm [thread:$0]  %s752, 2048, %s5, [#allocation5], 128, 128, 8
    $region45: #{tpu_custom_call.1} parent=1 // pred_fallthru
      _
    // Predicated region
    $region46: #{tpu_custom_call.1} parent=1 // pred_check
      _
    $region47: #{tpu_custom_call.1} parent=1 // pred_check_branch
      %759 = sbr.rel (0) target = $region49
    $region48: #{tpu_custom_call.1} parent=1 // pred_region
      %760 = dma.done [#allocation5], 2048
    $region49: #{tpu_custom_call.1} parent=1 // pred_fallthru
      _
    %761 = vsyncpa [#allocation4], 1
    %762 = vsyncpa [#allocation7], 1
    %763 = vsyncpa [#allocation5], 1

</llo_original>
